<compile_context>
chip_gen: v5e
topology: v5e:2x2
jax: 0.10.0
libtpu: 0.0.40
codegen_flags: <defaults>
</compile_context>

<pallas_src>
import functools

import jax
import jax.numpy as jnp
from jax.experimental import pallas as pl
from jax.experimental.pallas import tpu as pltpu


# ----------------------------------------------------------------------------
# Fused channel-attention kernel
#   grid = (N, HW_tiles); per batch n: accumulate spatial sum & max over tiles,
#   then on the last tile run the MLP + sigmoid and write the (1, 1, C) output.
# ----------------------------------------------------------------------------
def _ca_kernel(x_ref, fc1_ref, fc2_ref, o_ref, sum_ref, max_ref, *, inv_hw):
    j = pl.program_id(1)

    @pl.when(j == 0)
    def _init():
        sum_ref[...] = jnp.zeros_like(sum_ref)
        max_ref[...] = jnp.full_like(max_ref, -jnp.inf)

    xs = x_ref[0]                                                  # (tile_hw, C)
    sum_ref[...] += jnp.sum(xs, axis=0, keepdims=True)             # (1, C)
    max_ref[...] = jnp.maximum(max_ref[...],
                               jnp.max(xs, axis=0, keepdims=True))  # (1, C)

    @pl.when(j == pl.num_programs(1) - 1)
    def _finalize():
        avg = sum_ref[...] * inv_hw                                # (1, C)
        mx = max_ref[...]                                          # (1, C)
        fc1 = fc1_ref[...]                                         # (C, Cr)
        fc2 = fc2_ref[...]                                         # (Cr, C)
        h_avg = jnp.maximum(
            jnp.dot(avg, fc1, preferred_element_type=jnp.float32), 0.0)
        h_max = jnp.maximum(
            jnp.dot(mx, fc1, preferred_element_type=jnp.float32), 0.0)
        y = (jnp.dot(h_avg, fc2, preferred_element_type=jnp.float32)
             + jnp.dot(h_max, fc2, preferred_element_type=jnp.float32))  # (1, C)
        o_ref[...] = jax.nn.sigmoid(y).reshape(o_ref.shape)


def _pick_spatial_tile(hw):
    # Largest aligned tile that evenly divides H*W (keeps pipelining alive and
    # per-step VMEM small enough for v7x's 64 MiB VMEM at realistic sizes).
    for cand in (2048, 1024, 512, 256, 128, 64, 32, 16, 8):
        if hw % cand == 0:
            return cand
    return hw  # tiny / ragged fallback


def channel_attention(x_nchw, w1, w2):
    """x_nchw: (N, C, H, W) f32; w1: (Cr, C) fc1 weight; w2: (C, Cr) fc2 weight.
    Returns sigmoid attention of shape (N, C, 1, 1) (PyTorch convention)."""
    N, C, H, W = x_nchw.shape
    HW = H * W

    # Channels-last, spatially flattened: lane-dense channel axis.
    x = jnp.transpose(x_nchw, (0, 2, 3, 1)).reshape(N, HW, C).astype(jnp.float32)
    fc1 = jnp.transpose(w1).astype(jnp.float32)    # (C, Cr)
    fc2 = jnp.transpose(w2).astype(jnp.float32)    # (Cr, C)
    Cr = fc1.shape[1]

    tile_hw = _pick_spatial_tile(HW)
    grid = (N, HW // tile_hw)

    out = pl.pallas_call(
        functools.partial(_ca_kernel, inv_hw=1.0 / HW),
        out_shape=jax.ShapeDtypeStruct((N, 1, C), jnp.float32),
        grid_spec=pltpu.PrefetchScalarGridSpec(
            num_scalar_prefetch=0,
            grid=grid,
            in_specs=[
                pl.BlockSpec((1, tile_hw, C), lambda n, j: (n, j, 0)),
                pl.BlockSpec((C, Cr), lambda n, j: (0, 0)),
                pl.BlockSpec((Cr, C), lambda n, j: (0, 0)),
            ],
            out_specs=pl.BlockSpec((1, 1, C), lambda n, j: (n, 0, 0)),
            scratch_shapes=[
                pltpu.VMEM((1, C), jnp.float32),   # running spatial sum
                pltpu.VMEM((1, C), jnp.float32),   # running spatial max
            ],
        ),
        compiler_params=pltpu.CompilerParams(
            dimension_semantics=("parallel", "arbitrary")),
    )(x, fc1, fc2)

    return out.reshape(N, C, 1, 1)


# ----------------------------------------------------------------------------
# Pure-JAX reference (mirrors the PyTorch module exactly)
# ----------------------------------------------------------------------------
def reference(x_nchw, w1, w2):
    N, C, _, _ = x_nchw.shape
    avg = x_nchw.mean(axis=(2, 3))          # (N, C)
    mx = x_nchw.max(axis=(2, 3))            # (N, C)

    def mlp(v):
        return jax.nn.relu(v @ w1.T) @ w2.T

    return jax.nn.sigmoid(mlp(avg) + mlp(mx)).reshape(N, C, 1, 1)


if __name__ == "__main__":
    key = jax.random.PRNGKey(0)
    kx, k1, k2 = jax.random.split(key, 3)

    # Small shapes consistent with the module: in_planes must be >= 16
    # (the module hard-codes in_planes // 16 for the bottleneck width).
    N, C, H, W = 2, 32, 16, 16
    Cr = C // 16

    x = jax.random.normal(kx, (N, C, H, W), jnp.float32)
    w1 = 0.2 * jax.random.normal(k1, (Cr, C), jnp.float32)   # fc1: Conv2d(C, Cr, 1), squeezed
    w2 = 0.2 * jax.random.normal(k2, (C, Cr), jnp.float32)   # fc2: Conv2d(Cr, C, 1), squeezed

    ca = jax.jit(channel_attention)
    out = jax.block_until_ready(ca(x, w1, w2))

    ref = jax.block_until_ready(reference(x, w1, w2))
    assert out.shape == (N, C, 1, 1), out.shape
    assert jnp.allclose(out, ref, rtol=1e-4, atol=1e-5), float(jnp.max(jnp.abs(out - ref)))

    print("KERNEL_OK")
</pallas_src>

<mosaic_0001>
module attributes {stable_mosaic.version = 11 : i64} {
  func.func @_ca_kernel(%arg0: i32, %arg1: i32, %arg2: memref<1x256x32xf32, #tpu.memory_space<vmem>>, %arg3: memref<32x2xf32, #tpu.memory_space<vmem>>, %arg4: memref<2x32xf32, #tpu.memory_space<vmem>>, %arg5: memref<1x1x32xf32, #tpu.memory_space<vmem>>, %arg6: memref<1x32xf32, #tpu.memory_space<vmem>>, %arg7: memref<1x32xf32, #tpu.memory_space<vmem>>) attributes {dimension_semantics = [#tpu.dimension_semantics<parallel>, #tpu.dimension_semantics<arbitrary>], iteration_bounds = array<i64: 2, 1>, scalar_prefetch = 0 : i64, scratch_operands = 2 : i64, tpu.core_type = #tpu.core_type<tc>, window_params = [{transform_indices = @transform_0, window_bounds = array<i64: 1, 256, 32>}, {pipeline_mode = #tpu.pipeline_mode<synchronous>, transform_indices = @transform_1, window_bounds = array<i64: 32, 2>}, {pipeline_mode = #tpu.pipeline_mode<synchronous>, transform_indices = @transform_2, window_bounds = array<i64: 2, 32>}, {transform_indices = @transform_3, window_bounds = array<i64: 1, 1, 32>}]} {
    %c0_i32 = arith.constant 0 : i32
    %0 = arith.cmpi eq, %arg1, %c0_i32 : i32
    %1 = arith.extui %0 : i1 to i32
    %c0_i32_0 = arith.constant 0 : i32
    %2 = arith.cmpi ne, %1, %c0_i32_0 : i32
    scf.if %2 {
      %cst_14 = arith.constant 0.000000e+00 : f32
      %18 = vector.broadcast %cst_14 : f32 to vector<1x32xf32>
      %c0_15 = arith.constant 0 : index
      %c0_16 = arith.constant 0 : index
      %19 = vector.load %arg6[%c0_15, %c0_16] : memref<1x32xf32, #tpu.memory_space<vmem>>, vector<1x32xf32>
      tpu.vector_store %arg6[%c0_15, %c0_16], %18 {strides = array<i32>} : memref<1x32xf32, #tpu.memory_space<vmem>>, vector<1x32xf32>,
      %cst_17 = arith.constant 0xFF800000 : f32
      %20 = vector.broadcast %cst_17 : f32 to vector<1x32xf32>
      %c0_18 = arith.constant 0 : index
      %c0_19 = arith.constant 0 : index
      %21 = vector.load %arg7[%c0_18, %c0_19] : memref<1x32xf32, #tpu.memory_space<vmem>>, vector<1x32xf32>
      tpu.vector_store %arg7[%c0_18, %c0_19], %20 {strides = array<i32>} : memref<1x32xf32, #tpu.memory_space<vmem>>, vector<1x32xf32>,
    } else {
    }
    %c0 = arith.constant 0 : index
    %c0_1 = arith.constant 0 : index
    %c0_2 = arith.constant 0 : index
    %3 = vector.load %arg2[%c0, %c0_1, %c0_2] : memref<1x256x32xf32, #tpu.memory_space<vmem>>, vector<1x256x32xf32>
    %4 = vector.shape_cast %3 : vector<1x256x32xf32> to vector<256x32xf32>
    %c0_3 = arith.constant 0 : index
    %c0_4 = arith.constant 0 : index
    %5 = vector.load %arg6[%c0_3, %c0_4] : memref<1x32xf32, #tpu.memory_space<vmem>>, vector<1x32xf32>
    %cst = arith.constant dense<0.000000e+00> : vector<32xf32>
    %6 = vector.multi_reduction <add>, %4, %cst [0] : vector<256x32xf32> to vector<32xf32>
    %7 = vector.shape_cast %6 : vector<32xf32> to vector<1x32xf32>
    %8 = arith.addf %5, %7 : vector<1x32xf32>
    %c0_5 = arith.constant 0 : index
    %c0_6 = arith.constant 0 : index
    %9 = vector.load %arg6[%c0_5, %c0_6] : memref<1x32xf32, #tpu.memory_space<vmem>>, vector<1x32xf32>
    tpu.vector_store %arg6[%c0_5, %c0_6], %8 {strides = array<i32>} : memref<1x32xf32, #tpu.memory_space<vmem>>, vector<1x32xf32>,
    %c0_7 = arith.constant 0 : index
    %c0_8 = arith.constant 0 : index
    %10 = vector.load %arg7[%c0_7, %c0_8] : memref<1x32xf32, #tpu.memory_space<vmem>>, vector<1x32xf32>
    %cst_9 = arith.constant dense<0xFF800000> : vector<32xf32>
    %11 = vector.multi_reduction <maximumf>, %4, %cst_9 [0] : vector<256x32xf32> to vector<32xf32>
    %12 = vector.shape_cast %11 : vector<32xf32> to vector<1x32xf32>
    %13 = arith.maximumf %10, %12 : vector<1x32xf32>
    %c0_10 = arith.constant 0 : index
    %c0_11 = arith.constant 0 : index
    %14 = vector.load %arg7[%c0_10, %c0_11] : memref<1x32xf32, #tpu.memory_space<vmem>>, vector<1x32xf32>
    tpu.vector_store %arg7[%c0_10, %c0_11], %13 {strides = array<i32>} : memref<1x32xf32, #tpu.memory_space<vmem>>, vector<1x32xf32>,
    %c0_i32_12 = arith.constant 0 : i32
    %15 = arith.cmpi eq, %arg1, %c0_i32_12 : i32
    %16 = arith.extui %15 : i1 to i32
    %c0_i32_13 = arith.constant 0 : i32
    %17 = arith.cmpi ne, %16, %c0_i32_13 : i32
    scf.if %17 {
      %c0_14 = arith.constant 0 : index
      %c0_15 = arith.constant 0 : index
      %18 = vector.load %arg6[%c0_14, %c0_15] : memref<1x32xf32, #tpu.memory_space<vmem>>, vector<1x32xf32>
      %cst_16 = arith.constant 3.906250e-03 : f32
      %19 = vector.broadcast %cst_16 : f32 to vector<1x32xf32>
      %20 = arith.mulf %18, %19 : vector<1x32xf32>
      %c0_17 = arith.constant 0 : index
      %c0_18 = arith.constant 0 : index
      %21 = vector.load %arg7[%c0_17, %c0_18] : memref<1x32xf32, #tpu.memory_space<vmem>>, vector<1x32xf32>
      %c0_19 = arith.constant 0 : index
      %c0_20 = arith.constant 0 : index
      %22 = vector.load %arg3[%c0_19, %c0_20] : memref<32x2xf32, #tpu.memory_space<vmem>>, vector<32x2xf32>
      %c0_21 = arith.constant 0 : index
      %c0_22 = arith.constant 0 : index
      %23 = vector.load %arg4[%c0_21, %c0_22] : memref<2x32xf32, #tpu.memory_space<vmem>>, vector<2x32xf32>
      %cst_23 = arith.constant dense<0.000000e+00> : vector<1x2xf32>
      %24 = tpu.matmul %20, %22, %cst_23 {dimension_numbers = #tpu.dot_dimension_numbers<[1], [0], [0], [1], [0, 0, 1, 1], [], []>} : vector<1x32xf32>, vector<32x2xf32>, vector<1x2xf32> -> vector<1x2xf32>
      %cst_24 = arith.constant 0.000000e+00 : f32
      %25 = vector.broadcast %cst_24 : f32 to vector<1x2xf32>
      %26 = arith.maximumf %24, %25 : vector<1x2xf32>
      %cst_25 = arith.constant dense<0.000000e+00> : vector<1x2xf32>
      %27 = tpu.matmul %21, %22, %cst_25 {dimension_numbers = #tpu.dot_dimension_numbers<[1], [0], [0], [1], [0, 0, 1, 1], [], []>} : vector<1x32xf32>, vector<32x2xf32>, vector<1x2xf32> -> vector<1x2xf32>
      %cst_26 = arith.constant 0.000000e+00 : f32
      %28 = vector.broadcast %cst_26 : f32 to vector<1x2xf32>
      %29 = arith.maximumf %27, %28 : vector<1x2xf32>
      %cst_27 = arith.constant dense<0.000000e+00> : vector<1x32xf32>
      %30 = tpu.matmul %26, %23, %cst_27 {dimension_numbers = #tpu.dot_dimension_numbers<[1], [0], [0], [1], [0, 0, 1, 1], [], []>} : vector<1x2xf32>, vector<2x32xf32>, vector<1x32xf32> -> vector<1x32xf32>
      %cst_28 = arith.constant dense<0.000000e+00> : vector<1x32xf32>
      %31 = tpu.matmul %29, %23, %cst_28 {dimension_numbers = #tpu.dot_dimension_numbers<[1], [0], [0], [1], [0, 0, 1, 1], [], []>} : vector<1x2xf32>, vector<2x32xf32>, vector<1x32xf32> -> vector<1x32xf32>
      %32 = arith.addf %30, %31 : vector<1x32xf32>
      %33 = arith.negf %32 : vector<1x32xf32>
      %34 = math.exp %33 : vector<1x32xf32>
      %cst_29 = arith.constant 1.000000e+00 : f32
      %35 = vector.broadcast %cst_29 : f32 to vector<1x32xf32>
      %36 = arith.addf %35, %34 : vector<1x32xf32>
      %37 = arith.divf %35, %36 : vector<1x32xf32>
      %38 = vector.shape_cast %37 : vector<1x32xf32> to vector<1x1x32xf32>
      %c0_30 = arith.constant 0 : index
      %c0_31 = arith.constant 0 : index
      %c0_32 = arith.constant 0 : index
      %39 = vector.load %arg5[%c0_30, %c0_31, %c0_32] : memref<1x1x32xf32, #tpu.memory_space<vmem>>, vector<1x1x32xf32>
      tpu.vector_store %arg5[%c0_30, %c0_31, %c0_32], %38 {strides = array<i32>} : memref<1x1x32xf32, #tpu.memory_space<vmem>>, vector<1x1x32xf32>,
    } else {
    }
    return
  }
  func.func @transform_0(%arg0: i32, %arg1: i32) -> (i32, i32, i32) {
    %c0_i32 = arith.constant 0 : i32
    %c0_i32_0 = arith.constant 0 : i32
    return %arg0, %arg1, %c0_i32 : i32, i32, i32
  }
  func.func @transform_1(%arg0: i32, %arg1: i32) -> (i32, i32) {
    %c0_i32 = arith.constant 0 : i32
    %c0_i32_0 = arith.constant 0 : i32
    %c0_i32_1 = arith.constant 0 : i32
    return %c0_i32, %c0_i32_0 : i32, i32
  }
  func.func @transform_2(%arg0: i32, %arg1: i32) -> (i32, i32) {
    %c0_i32 = arith.constant 0 : i32
    %c0_i32_0 = arith.constant 0 : i32
    %c0_i32_1 = arith.constant 0 : i32
    return %c0_i32, %c0_i32_0 : i32, i32
  }
  func.func @transform_3(%arg0: i32, %arg1: i32) -> (i32, i32, i32) {
    %c0_i32 = arith.constant 0 : i32
    %c0_i32_0 = arith.constant 0 : i32
    %c0_i32_1 = arith.constant 0 : i32
    return %arg0, %c0_i32, %c0_i32_0 : i32, i32, i32
  }
}

</mosaic_0001>

<llo_original>
// kernel: channel_attention.1
$region0: #{channel_attention.1}
  #allocation0 [shape = 'u32[]', space=smem, size = 0x4, offset = 0x4, fixed_abs, tag = 'smem constant byte address 0x4 - core index']
  #allocation1 [shape = 'u32[72,128]{1,0:T(1,128)}', space=vmem, size = 0x9000, scoped, tag = 'internal scratch']
  #allocation2 [shape = 'f32[1,32]{1,0:T(1,128)}', space=vmem, size = 0x200, scoped, tag = 'scratch operand']
  #allocation3 [shape = 'f32[1,32]{1,0:T(1,128)}', space=vmem, size = 0x200, scoped, tag = 'scratch operand']
  %s0 = inlined_call_operand.hbm [shape: f32[2,256,32], index: 0, kind: input, shape index: {}]
  %s1 = inlined_call_operand.vmem [shape: f32[32,2], index: 1, kind: input, shape index: {}]
  %s2 = inlined_call_operand.vmem [shape: f32[2,32], index: 2, kind: input, shape index: {}]
  %s3 = inlined_call_operand.hbm [shape: f32[2,1,32], index: 3, kind: output, shape index: {}]
  %s4 = sld [smem:[#allocation0]]
  $region57: #{channel_attention.1} parent=0
    _
  %s6 = ssub.s32 1, %s4
  %s7 = scalar_select 0, %s6, %s4
  $region1: #{channel_attention.1} parent=0
    #allocation4 [shape = 'u8[262144]{0}', space=vmem, size = 0x40000, scoped, tag = 'input window, operand 0']
    #allocation5 [shape = 's32[2]{0}', space=sflag, size = 0x8, scoped, tag = 'scoped memory for channel_attention.1']
    #allocation6 [shape = 's32[2]{0}', space=sflag, size = 0x8, scoped, tag = 'scoped memory for channel_attention.1']
    #allocation7 [shape = 'u8[1024]{0}', space=vmem, size = 0x400, scoped, tag = 'output window, operand 0']
    %8 = vsyncpa [#allocation5], 0
    %s9 = scalar_lea.sflag [#allocation5], 1
    %10 = vsyncpa %s9, 0
    %11 = vsyncpa [#allocation6], 0
    %s12 = scalar_lea.sflag [#allocation6], 1
    %13 = vsyncpa %s12, 0
    loop: start=0, step=1, limit=4
    $region2: #{channel_attention.1} parent=1 // loop_pre_header
      _
    $region3: #{channel_attention.1} parent=1 // loop_header
      %s15 = sphi 0, %s19
      %p16 = scmp.ge.s32.totalorder %s15, 4
      %s22 = sphi 0, %s34
      %s23 = sphi 0, %s30
      %s24 = sphi 0, %s22
      %s25 = sphi 0, %s23
      %s26 = sphi 0, %s24
      %s27 = sphi 0, %s25
      %s39 = sphi 0, %s41
      %s42 = sphi 0, %s39
      %s43 = sphi 0, %s42
      %s59 = sphi 0, %s43
      %s63 = sphi 0, %s63
      %s65 = sphi 0, %s63
      %s66 = sphi 0, %s65
      %s80 = sphi 0, %s66
      %s84 = sphi 0, %s84
      %s86 = sphi 0, %s84
      %s87 = sphi 0, %s86
      %s101 = sphi 0, %s87
      %s107 = sphi 0, %s109
      %s110 = sphi 0, %s107
      %s111 = sphi 0, %s110
      %s127 = sphi 0, %s111
    $region4: #{channel_attention.1} parent=1 // loop_header_branch
      %18 = sbr.rel (%p16) target = $region8
    $region5: #{channel_attention.1} parent=1 // loop_body
      %s20 = ssub.s32 %s15, 1
      %s21 = ssub.s32 %s15, 2
      %s28 = sadd.s32 1, %s23
      %p29 = scmp.ge.s32.totalorder %s28, 1
      %s30 = scalar_select %p29, 0, %s28
      %s31 = sadd.s32 1, %s22
      %s32 = scalar_select %p29, %s31, %s22
      %p33 = scmp.ge.s32.totalorder %s32, 2
      %s34 = scalar_select %p33, 0, %s32
      %s35 = ssub.s32 %s22, %s34
      %s36 = ssub.s32 %s23, %s30
      %s37 = sor.u32 %s35, %s36
      %p38 = scmp.eq.s32.totalorder %s37, 0
      %s40 = sadd.s32 %s39, 1
      %s41 = scalar_select %p38, %s39, %s40
      %p44 = pneg %p38
      %p45 = scmp.eq.s32.totalorder %s15, 1
      %p46 = por %p44, %p45
      %p47 = scmp.ne.s32.totalorder %s39, %s42
      %p48 = scmp.eq.s32.totalorder %s15, 0
      %p49 = por %p47, %p48
      %p50 = scmp.ne.s32.totalorder %s39, %s42
      %p51 = scmp.eq.s32.totalorder %s20, 1
      %p52 = por %p50, %p51
      %p53 = scmp.ne.s32.totalorder %s42, %s43
      %p54 = scmp.eq.s32.totalorder %s20, 0
      %p55 = por %p53, %p54
      %p56 = scmp.ne.s32.totalorder %s42, %s43
      %p57 = scmp.eq.s32.totalorder %s21, 1
      %p58 = por %p56, %p57
      %p60 = scmp.ne.s32.totalorder %s43, %s59
      %p61 = scmp.eq.s32.totalorder %s21, 0
      %p62 = por %p60, %p61
      %s64 = sadd.s32 %s63, 1
      %p67 = scmp.eq.s32.totalorder %s15, 1
      %p68 = scmp.ne.s32.totalorder %s63, %s65
      %p69 = scmp.eq.s32.totalorder %s15, 0
      %p70 = por %p68, %p69
      %p71 = scmp.ne.s32.totalorder %s63, %s65
      %p72 = scmp.eq.s32.totalorder %s20, 1
      %p73 = por %p71, %p72
      %p74 = scmp.ne.s32.totalorder %s65, %s66
      %p75 = scmp.eq.s32.totalorder %s20, 0
      %p76 = por %p74, %p75
      %p77 = scmp.ne.s32.totalorder %s65, %s66
      %p78 = scmp.eq.s32.totalorder %s21, 1
      %p79 = por %p77, %p78
      %p81 = scmp.ne.s32.totalorder %s66, %s80
      %p82 = scmp.eq.s32.totalorder %s21, 0
      %p83 = por %p81, %p82
      %s85 = sadd.s32 %s84, 1
      %p88 = scmp.eq.s32.totalorder %s15, 1
      %p89 = scmp.ne.s32.totalorder %s84, %s86
      %p90 = scmp.eq.s32.totalorder %s15, 0
      %p91 = por %p89, %p90
      %p92 = scmp.ne.s32.totalorder %s84, %s86
      %p93 = scmp.eq.s32.totalorder %s20, 1
      %p94 = por %p92, %p93
      %p95 = scmp.ne.s32.totalorder %s86, %s87
      %p96 = scmp.eq.s32.totalorder %s20, 0
      %p97 = por %p95, %p96
      %p98 = scmp.ne.s32.totalorder %s86, %s87
      %p99 = scmp.eq.s32.totalorder %s21, 1
      %p100 = por %p98, %p99
      %p102 = scmp.ne.s32.totalorder %s87, %s101
      %p103 = scmp.eq.s32.totalorder %s21, 0
      %p104 = por %p102, %p103
      %s105 = ssub.s32 %s22, %s34
      %p106 = scmp.eq.s32.totalorder %s105, 0
      %s108 = sadd.s32 %s107, 1
      %s109 = scalar_select %p106, %s107, %s108
      %p112 = pneg %p106
      %p113 = scmp.eq.s32.totalorder %s15, 1
      %p114 = por %p112, %p113
      %p115 = scmp.ne.s32.totalorder %s107, %s110
      %p116 = scmp.eq.s32.totalorder %s15, 0
      %p117 = por %p115, %p116
      %p118 = scmp.ne.s32.totalorder %s107, %s110
      %p119 = scmp.eq.s32.totalorder %s20, 1
      %p120 = por %p118, %p119
      %p121 = scmp.ne.s32.totalorder %s110, %s111
      %p122 = scmp.eq.s32.totalorder %s20, 0
      %p123 = por %p121, %p122
      %p124 = scmp.ne.s32.totalorder %s110, %s111
      %p125 = scmp.eq.s32.totalorder %s21, 1
      %p126 = por %p124, %p125
      %p128 = scmp.ne.s32.totalorder %s111, %s127
      %p129 = scmp.eq.s32.totalorder %s21, 0
      %p130 = por %p128, %p129
      %p131 = scmp.le.s32.totalorder 1, %s15
      %p132 = scmp.lt.s32.totalorder %s15, 3
      %p133 = pnand %p131, %p132
      %p134 = pneg %p133
      // Predicated region
      $region9: #{channel_attention.1} parent=5 // pred_check
        _
      $region10: #{channel_attention.1} parent=5 // pred_check_branch
        %136 = sbr.rel (%p133) target = $region12
      $region11: #{channel_attention.1} parent=5 // pred_region
        %s137 = ssub.s32 %s15, 1
        // Predicated region
        $region13: #{channel_attention.1} parent=11 // pred_check
          %p138 = pneg %p76
        $region14: #{channel_attention.1} parent=11 // pred_check_branch
          %140 = sbr.rel (%p138) target = $region16
        $region15: #{channel_attention.1} parent=11 // pred_region
          _
        $region16: #{channel_attention.1} parent=11 // pred_fallthru
          _
        // Predicated region
        $region17: #{channel_attention.1} parent=11 // pred_check
          %p141 = pneg %p97
        $region18: #{channel_attention.1} parent=11 // pred_check_branch
          %143 = sbr.rel (%p141) target = $region20
        $region19: #{channel_attention.1} parent=11 // pred_region
          _
        $region20: #{channel_attention.1} parent=11 // pred_fallthru
          _
      $region12: #{channel_attention.1} parent=5 // pred_fallthru
        _
      %p144 = scmp.lt.s32.totalorder %s15, 2
      // Predicated region
      $region21: #{channel_attention.1} parent=5 // pred_check
        %p145 = pneg %p144
      $region22: #{channel_attention.1} parent=5 // pred_check_branch
        %147 = sbr.rel (%p145) target = $region24
      $region23: #{channel_attention.1} parent=5 // pred_region
        // Predicated region
        $region25: #{channel_attention.1} parent=23 // pred_check
          %p148 = pneg %p49
        $region26: #{channel_attention.1} parent=23 // pred_check_branch
          %150 = sbr.rel (%p148) target = $region28
        $region27: #{channel_attention.1} parent=23 // pred_region
          %s151 = sand.u32 %s39, 1
          %s152 = scalar_lea.sflag [#allocation5], %s151
          %s153 = sand.u32 %s39, 1
          %s154 = smul.addr %s153, 256
          %s155 = scalar_lea.vmem [#allocation4], %s154
          %s156 = smul.u32 32, %s23
          %158 = vsyncadd %s152, 0
          %s159 = smul.addr %s22, 32
          %s160 = sadd.s32 %s156, %s159
          %s161 = smul.addr %s160, 8
          %s162 = scalar_lea.hbm %s0, %s161
          %s163 = sshll.u32 %s162, 4
          %s164 = int_to_ptr.hbm [resolvable:$true] %s163
          %s165 = sshll.u32 %s155, 4
          %s166 = int_to_ptr.vmem [resolvable:$true] %s165
          %171 = dma.hbm_to_vmem [thread:$0]  %s164, 4096, %s166, %s152, 128, 128, 8
        $region28: #{channel_attention.1} parent=23 // pred_fallthru
          _
      $region24: #{channel_attention.1} parent=5 // pred_fallthru
        _
      %p172 = scmp.le.s32.totalorder 1, %s15
      %p173 = scmp.lt.s32.totalorder %s15, 3
      %p174 = pnand %p172, %p173
      %p175 = pneg %p174
      // Predicated region
      $region29: #{channel_attention.1} parent=5 // pred_check
        _
      $region30: #{channel_attention.1} parent=5 // pred_check_branch
        %177 = sbr.rel (%p174) target = $region32
      $region31: #{channel_attention.1} parent=5 // pred_region
        %s178 = ssub.s32 %s15, 1
        %s179 = sand.u32 %s42, 1
        %s180 = scalar_lea.sflag [#allocation5], %s179
        %s181 = sand.u32 %s42, 1
        %s182 = smul.addr %s181, 256
        %s183 = scalar_lea.vmem [#allocation4], %s182
        // Predicated region
        $region33: #{channel_attention.1} parent=31 // pred_check
          %p184 = pneg %p55
        $region34: #{channel_attention.1} parent=31 // pred_check_branch
          %186 = sbr.rel (%p184) target = $region36
        $region35: #{channel_attention.1} parent=31 // pred_region
          %188 = dma.done %s180, 4096
        $region36: #{channel_attention.1} parent=31 // pred_fallthru
          _
        %s189 = sand.u32 %s42, 1
        %s190 = scalar_lea.sflag [#allocation5], %s189
        %s191 = sand.u32 %s42, 1
        %s192 = smul.addr %s191, 256
        %s193 = scalar_lea.vmem [#allocation4], %s192
        %p194 = pneg %p55
        %p195 = pneg %p52
        %p196 = pneg %p76
        %p197 = pneg %p73
        %p198 = pneg %p97
        %p199 = pneg %p94
        %p200 = pneg %p123
        %p201 = pneg %p120
        %s202 = sand.u32 %s110, 1
        %s203 = scalar_lea.sflag [#allocation6], %s202
        %s204 = sand.u32 %s110, 1
        %s205 = scalar_lea.vmem [#allocation7], %s204
        %s206 = smul.u32 32, %s25
        %p207 = scmp.eq.s32.totalorder %s25, 0
        // Predicated region
        $region37: #{channel_attention.1} parent=31 // pred_check
          %p208 = pneg %p207
        $region38: #{channel_attention.1} parent=31 // pred_check_branch
          %210 = sbr.rel (%p208) target = $region40
        $region39: #{channel_attention.1} parent=31 // pred_region
          %vm211 = vcmask 253952
          %212 = vst.msk [vmem:[#allocation2] sm:$0x1] %vm211, 0.0
          %213 = vst.msk [vmem:[#allocation3] sm:$0x1] %vm211, -inf
        $region40: #{channel_attention.1} parent=31 // pred_fallthru
          _
        %v214 = vld [vmem:[%s183] sm:$0xff]
        %v215 = vld [vmem:[%s183 + $0x8] sm:$0xff]
        %v216 = vld [vmem:[%s183 + $0x10] sm:$0xff]
        %v217 = vld [vmem:[%s183 + $0x18] sm:$0xff]
        %v218 = vld [vmem:[%s183 + $0x20] sm:$0xff]
        %v219 = vld [vmem:[%s183 + $0x28] sm:$0xff]
        %v220 = vld [vmem:[%s183 + $0x30] sm:$0xff]
        %v221 = vld [vmem:[%s183 + $0x38] sm:$0xff]
        %v222 = vld [vmem:[%s183 + $0x40] sm:$0xff]
        %v223 = vld [vmem:[%s183 + $0x48] sm:$0xff]
        %v224 = vld [vmem:[%s183 + $0x50] sm:$0xff]
        %v225 = vld [vmem:[%s183 + $0x58] sm:$0xff]
        %v226 = vld [vmem:[%s183 + $0x60] sm:$0xff]
        %v227 = vld [vmem:[%s183 + $0x68] sm:$0xff]
        %v228 = vld [vmem:[%s183 + $0x70] sm:$0xff]
        %v229 = vld [vmem:[%s183 + $0x78] sm:$0xff]
        %v230 = vld [vmem:[%s183 + $0x80] sm:$0xff]
        %v231 = vld [vmem:[%s183 + $0x88] sm:$0xff]
        %v232 = vld [vmem:[%s183 + $0x90] sm:$0xff]
        %v233 = vld [vmem:[%s183 + $0x98] sm:$0xff]
        %v234 = vld [vmem:[%s183 + $0xa0] sm:$0xff]
        %v235 = vld [vmem:[%s183 + $0xa8] sm:$0xff]
        %v236 = vld [vmem:[%s183 + $0xb0] sm:$0xff]
        %v237 = vld [vmem:[%s183 + $0xb8] sm:$0xff]
        %v238 = vld [vmem:[%s183 + $0xc0] sm:$0xff]
        %v239 = vld [vmem:[%s183 + $0xc8] sm:$0xff]
        %v240 = vld [vmem:[%s183 + $0xd0] sm:$0xff]
        %v241 = vld [vmem:[%s183 + $0xd8] sm:$0xff]
        %v242 = vld [vmem:[%s183 + $0xe0] sm:$0xff]
        %v243 = vld [vmem:[%s183 + $0xe8] sm:$0xff]
        %v244 = vld [vmem:[%s183 + $0xf0] sm:$0xff]
        %v245 = vld [vmem:[%s183 + $0xf8] sm:$0xff]
        %v246 = vld [vmem:[#allocation2] sm:$0x1]
        %vm247 = vcmask 261120
        %v248 = vsel %vm247, %v214, 0.0
        %v249 = vsel %vm247, %v215, 0.0
        %v250 = vadd.f32 %v248, %v249
        %v251 = vsel %vm247, %v216, 0.0
        %v252 = vadd.f32 %v250, %v251
        %v253 = vsel %vm247, %v217, 0.0
        %v254 = vadd.f32 %v252, %v253
        %v255 = vsel %vm247, %v218, 0.0
        %v256 = vadd.f32 %v254, %v255
        %v257 = vsel %vm247, %v219, 0.0
        %v258 = vadd.f32 %v256, %v257
        %v259 = vsel %vm247, %v220, 0.0
        %v260 = vadd.f32 %v258, %v259
        %v261 = vsel %vm247, %v221, 0.0
        %v262 = vadd.f32 %v260, %v261
        %v263 = vsel %vm247, %v222, 0.0
        %v264 = vadd.f32 %v262, %v263
        %v265 = vsel %vm247, %v223, 0.0
        %v266 = vadd.f32 %v264, %v265
        %v267 = vsel %vm247, %v224, 0.0
        %v268 = vadd.f32 %v266, %v267
        %v269 = vsel %vm247, %v225, 0.0
        %v270 = vadd.f32 %v268, %v269
        %v271 = vsel %vm247, %v226, 0.0
        %v272 = vadd.f32 %v270, %v271
        %v273 = vsel %vm247, %v227, 0.0
        %v274 = vadd.f32 %v272, %v273
        %v275 = vsel %vm247, %v228, 0.0
        %v276 = vadd.f32 %v274, %v275
        %v277 = vsel %vm247, %v229, 0.0
        %v278 = vadd.f32 %v276, %v277
        %v279 = vsel %vm247, %v230, 0.0
        %v280 = vadd.f32 %v278, %v279
        %v281 = vsel %vm247, %v231, 0.0
        %v282 = vadd.f32 %v280, %v281
        %v283 = vsel %vm247, %v232, 0.0
        %v284 = vadd.f32 %v282, %v283
        %v285 = vsel %vm247, %v233, 0.0
        %v286 = vadd.f32 %v284, %v285
        %v287 = vsel %vm247, %v234, 0.0
        %v288 = vadd.f32 %v286, %v287
        %v289 = vsel %vm247, %v235, 0.0
        %v290 = vadd.f32 %v288, %v289
        %v291 = vsel %vm247, %v236, 0.0
        %v292 = vadd.f32 %v290, %v291
        %v293 = vsel %vm247, %v237, 0.0
        %v294 = vadd.f32 %v292, %v293
        %v295 = vsel %vm247, %v238, 0.0
        %v296 = vadd.f32 %v294, %v295
        %v297 = vsel %vm247, %v239, 0.0
        %v298 = vadd.f32 %v296, %v297
        %v299 = vsel %vm247, %v240, 0.0
        %v300 = vadd.f32 %v298, %v299
        %v301 = vsel %vm247, %v241, 0.0
        %v302 = vadd.f32 %v300, %v301
        %v303 = vsel %vm247, %v242, 0.0
        %v304 = vadd.f32 %v302, %v303
        %v305 = vsel %vm247, %v243, 0.0
        %v306 = vadd.f32 %v304, %v305
        %v307 = vsel %vm247, %v244, 0.0
        %v308 = vadd.f32 %v306, %v307
        %v309 = vsel %vm247, %v245, 0.0
        %v310 = vadd.f32 %v308, %v309
        %v311 = vrot.slane %v310, 4
        %v312 = vadd.f32 %v310, %v311
        %v313 = vrot.slane %v312, 2
        %v314 = vadd.f32 %v312, %v313
        %v315 = vrot.slane %v314, 1
        %v316 = vadd.f32 %v314, %v315
        %v317 = vadd.f32 %v246, %v316
        %vm318 = vcmask 253952
        %319 = vst.msk [vmem:[#allocation2] sm:$0x1] %vm318, %v317
        %v320 = vld [vmem:[#allocation3] sm:$0x1]
        %v321 = vsel %vm247, %v214, -inf
        %v322 = vsel %vm247, %v215, -inf
        %v323 = vsel %vm247, %v216, -inf
        %v324 = vsel %vm247, %v217, -inf
        %v325 = vsel %vm247, %v218, -inf
        %v326 = vmax.f32 %v321, %v325
        %v327 = vsel %vm247, %v219, -inf
        %v328 = vmax.f32 %v322, %v327
        %v329 = vsel %vm247, %v220, -inf
        %v330 = vmax.f32 %v323, %v329
        %v331 = vsel %vm247, %v221, -inf
        %v332 = vmax.f32 %v324, %v331
        %v333 = vsel %vm247, %v222, -inf
        %v334 = vmax.f32 %v326, %v333
        %v335 = vsel %vm247, %v223, -inf
        %v336 = vmax.f32 %v328, %v335
        %v337 = vsel %vm247, %v224, -inf
        %v338 = vmax.f32 %v330, %v337
        %v339 = vsel %vm247, %v225, -inf
        %v340 = vmax.f32 %v332, %v339
        %v341 = vsel %vm247, %v226, -inf
        %v342 = vmax.f32 %v334, %v341
        %v343 = vsel %vm247, %v227, -inf
        %v344 = vmax.f32 %v336, %v343
        %v345 = vsel %vm247, %v228, -inf
        %v346 = vmax.f32 %v338, %v345
        %v347 = vsel %vm247, %v229, -inf
        %v348 = vmax.f32 %v340, %v347
        %v349 = vsel %vm247, %v230, -inf
        %v350 = vmax.f32 %v342, %v349
        %v351 = vsel %vm247, %v231, -inf
        %v352 = vmax.f32 %v344, %v351
        %v353 = vsel %vm247, %v232, -inf
        %v354 = vmax.f32 %v346, %v353
        %v355 = vsel %vm247, %v233, -inf
        %v356 = vmax.f32 %v348, %v355
        %v357 = vsel %vm247, %v234, -inf
        %v358 = vmax.f32 %v350, %v357
        %v359 = vsel %vm247, %v235, -inf
        %v360 = vmax.f32 %v352, %v359
        %v361 = vsel %vm247, %v236, -inf
        %v362 = vmax.f32 %v354, %v361
        %v363 = vsel %vm247, %v237, -inf
        %v364 = vmax.f32 %v356, %v363
        %v365 = vsel %vm247, %v238, -inf
        %v366 = vmax.f32 %v358, %v365
        %v367 = vsel %vm247, %v239, -inf
        %v368 = vmax.f32 %v360, %v367
        %v369 = vsel %vm247, %v240, -inf
        %v370 = vmax.f32 %v362, %v369
        %v371 = vsel %vm247, %v241, -inf
        %v372 = vmax.f32 %v364, %v371
        %v373 = vsel %vm247, %v242, -inf
        %v374 = vmax.f32 %v366, %v373
        %v375 = vsel %vm247, %v243, -inf
        %v376 = vmax.f32 %v368, %v375
        %v377 = vsel %vm247, %v244, -inf
        %v378 = vmax.f32 %v370, %v377
        %v379 = vsel %vm247, %v245, -inf
        %v380 = vmax.f32 %v372, %v379
        %v381 = vmax.f32 %v374, %v376
        %v382 = vmax.f32 %v378, %v380
        %v383 = vmax.f32 %v381, %v382
        %v384 = vrot.slane %v383, 4
        %v385 = vmax.f32 %v383, %v384
        %v386 = vrot.slane %v385, 2
        %v387 = vmax.f32 %v385, %v386
        %v388 = vrot.slane %v387, 1
        %v389 = vmax.f32 %v387, %v388
        %v390 = vmax.f32 %v320, %v389
        %391 = vst.msk [vmem:[#allocation3] sm:$0x1] %vm318, %v390
        // Predicated region
        $region41: #{channel_attention.1} parent=31 // pred_check
          %p392 = pneg %p207
        $region42: #{channel_attention.1} parent=31 // pred_check_branch
          %394 = sbr.rel (%p392) target = $region44
        $region43: #{channel_attention.1} parent=31 // pred_region
          %v395 = vld [vmem:[#allocation2] sm:$0x1]
          %v396 = vmul.f32 %v395, 0.00390625
          %v397 = vld [vmem:[#allocation3] sm:$0x1]
          %v398 = vld [vmem:[%s1] sm:$0xff]
          %v399 = vld [vmem:[%s1 + $0x8] sm:$0xff]
          %v400 = vld [vmem:[%s1 + $0x10] sm:$0xff]
          %v401 = vld [vmem:[%s1 + $0x18] sm:$0xff]
          %v402 = vld [vmem:[%s2] sm:$0x3]
          %v404 = vsel %vm247, %v396, 0
          %406 = vmatpush.msra.mxu0 0.0
          %407 = vmatpush.msra.mxu0 0.0
          %408 = vmatpush.msra.mxu0 0.0
          %409 = vmatpush.msra.mxu0 0.0
          %410 = vmatpush.msra.mxu0 0.0
          %411 = vmatpush.msra.mxu0 0.0
          %412 = vmatpush.msra.mxu0 0.0
          %413 = vmatpush.msra.mxu0 0.0
          %414 = vmatpush.msra.mxu0 0.0
          %415 = vmatpush.msra.mxu0 0.0
          %416 = vmatpush.msra.mxu0 0.0
          %417 = vmatpush.msra.mxu0 0.0
          %418 = vmatpush.msra.mxu0 %v401
          %419 = vmatpush.msra.mxu0 %v400
          %420 = vmatpush.msra.mxu0 %v399
          %421 = vmatpush.msra.mxu0 %v398
          %422 = vmatmul.f32.gmra.mxu0 %v404
          %v423 = vpop.f32.mrf.mxu0
          %v424 = vadd.f32 0.0, %v423
          %425 = vdwg.mxu0
          %v426 = vmax.f32 %v424, 0.0
          %v428 = vsel %vm247, %v397, 0
          %430 = vmatpush.msra.mxu0 0.0
          %431 = vmatpush.msra.mxu0 0.0
          %432 = vmatpush.msra.mxu0 0.0
          %433 = vmatpush.msra.mxu0 0.0
          %434 = vmatpush.msra.mxu0 0.0
          %435 = vmatpush.msra.mxu0 0.0
          %436 = vmatpush.msra.mxu0 0.0
          %437 = vmatpush.msra.mxu0 0.0
          %438 = vmatpush.msra.mxu0 0.0
          %439 = vmatpush.msra.mxu0 0.0
          %440 = vmatpush.msra.mxu0 0.0
          %441 = vmatpush.msra.mxu0 0.0
          %442 = vmatpush.msra.mxu0 %v401
          %443 = vmatpush.msra.mxu0 %v400
          %444 = vmatpush.msra.mxu0 %v399
          %445 = vmatpush.msra.mxu0 %v398
          %446 = vmatmul.f32.gmra.mxu0 %v428
          %v447 = vpop.f32.mrf.mxu0
          %v448 = vadd.f32 0.0, %v447
          %449 = vdwg.mxu0
          %v450 = vmax.f32 %v448, 0.0
          %vm451 = vcmask 15360
          %v453 = vsel %vm451, %v450, 0
          %vm455 = vcmask 1041408
          %v457 = vsel %vm455, %v402, 0
          %459 = vmatpush.msra.mxu0 0.0
          %460 = vmatpush.msra.mxu0 0.0
          %461 = vmatpush.msra.mxu0 0.0
          %462 = vmatpush.msra.mxu0 0.0
          %463 = vmatpush.msra.mxu0 0.0
          %464 = vmatpush.msra.mxu0 0.0
          %465 = vmatpush.msra.mxu0 0.0
          %466 = vmatpush.msra.mxu0 0.0
          %467 = vmatpush.msra.mxu0 0.0
          %468 = vmatpush.msra.mxu0 0.0
          %469 = vmatpush.msra.mxu0 0.0
          %470 = vmatpush.msra.mxu0 0.0
          %471 = vmatpush.msra.mxu0 0.0
          %472 = vmatpush.msra.mxu0 0.0
          %473 = vmatpush.msra.mxu0 0.0
          %474 = vmatpush.msra.mxu0 %v457
          %475 = vmatmul.f32.gmra.mxu0 %v453
          %v476 = vpop.f32.mrf.mxu0
          %v477 = vadd.f32 0.0, %v476
          %478 = vdwg.mxu0
          %v480 = vsel %vm451, %v426, 0
          %482 = vmatpush.msra.mxu0 0.0
          %483 = vmatpush.msra.mxu0 0.0
          %484 = vmatpush.msra.mxu0 0.0
          %485 = vmatpush.msra.mxu0 0.0
          %486 = vmatpush.msra.mxu0 0.0
          %487 = vmatpush.msra.mxu0 0.0
          %488 = vmatpush.msra.mxu0 0.0
          %489 = vmatpush.msra.mxu0 0.0
          %490 = vmatpush.msra.mxu0 0.0
          %491 = vmatpush.msra.mxu0 0.0
          %492 = vmatpush.msra.mxu0 0.0
          %493 = vmatpush.msra.mxu0 0.0
          %494 = vmatpush.msra.mxu0 0.0
          %495 = vmatpush.msra.mxu0 0.0
          %496 = vmatpush.msra.mxu0 0.0
          %497 = vmatpush.msra.mxu0 %v457
          %498 = vmatmul.f32.gmra.mxu0 %v480
          %v499 = vpop.f32.mrf.mxu0
          %v500 = vadd.f32 %v477, %v499
          %501 = vdwg.mxu0
          %v502 = vxor.u32 %v500, 2147483648
          %v503 = vmul.f32 %v502, 1.442695
          %v504 = vpow.pop %v503
          %v505 = vadd.f32 %v504, 1.0
          %v506 = vrcp.pop %v505
          %v507 = vmul.f32 %v505, %v506
          %v508 = vsub.f32 1.0, %v507
          %v509 = vmul.f32 %v506, %v508
          %v510 = vadd.f32 %v506, %v509
          %vm511 = vweird.f32 %v505
          %vm512 = vweird.f32 %v506
          %vm513 = vmor %vm511, %vm512
          %v514 = vsel %vm513, %v506, %v510
          %v515 = vand.u32 2147483647, %v505
          %vm516 = vcmp.eq.f32.partialorder %v515, 8.507059e+37
          %v517 = vand.u32 %v505, 2147483648
          %v518 = vor.u32 1.1754944e-38, %v517
          %v519 = vsel %vm516, %v518, %v514
          %v520 = vmul.f32 1.0, %v519
          %521 = vst.msk [vmem:[%s205] sm:$0x1] %vm318, %v520
        $region44: #{channel_attention.1} parent=31 // pred_fallthru
          _
        %s522 = sand.u32 %s110, 1
        %s523 = scalar_lea.sflag [#allocation6], %s522
        %s524 = sand.u32 %s110, 1
        %s525 = scalar_lea.vmem [#allocation7], %s524
        // Predicated region
        $region45: #{channel_attention.1} parent=31 // pred_check
          %p526 = pneg %p120
        $region46: #{channel_attention.1} parent=31 // pred_check_branch
          %528 = sbr.rel (%p526) target = $region48
        $region47: #{channel_attention.1} parent=31 // pred_region
          %530 = vsyncadd %s523, 0
          %s531 = scalar_lea.hbm %s3, %s24
          %s533 = sshll.u32 %s525, 4
          %s534 = int_to_ptr.vmem [resolvable:$true] %s533
          %s535 = sshll.u32 %s531, 4
          %s536 = int_to_ptr.hbm [resolvable:$true] %s535
          %538 = dma.vmem_to_hbm [thread:$0]  %s534, 16, %s536, %s523
        $region48: #{channel_attention.1} parent=31 // pred_fallthru
          _
      $region32: #{channel_attention.1} parent=5 // pred_fallthru
        _
      %p539 = scmp.le.s32.totalorder 2, %s15
      // Predicated region
      $region49: #{channel_attention.1} parent=5 // pred_check
        %p540 = pneg %p539
      $region50: #{channel_attention.1} parent=5 // pred_check_branch
        %542 = sbr.rel (%p540) target = $region52
      $region51: #{channel_attention.1} parent=5 // pred_region
        %s543 = ssub.s32 %s15, 2
        // Predicated region
        $region53: #{channel_attention.1} parent=51 // pred_check
          %p544 = pneg %p126
        $region54: #{channel_attention.1} parent=51 // pred_check_branch
          %546 = sbr.rel (%p544) target = $region56
        $region55: #{channel_attention.1} parent=51 // pred_region
          %s547 = sand.u32 %s111, 1
          %s548 = scalar_lea.sflag [#allocation6], %s547
          %s549 = sand.u32 %s111, 1
          %s550 = scalar_lea.vmem [#allocation7], %s549
          %552 = dma.done %s548, 16
        $region56: #{channel_attention.1} parent=51 // pred_fallthru
          _
      $region52: #{channel_attention.1} parent=5 // pred_fallthru
        _
    $region6: #{channel_attention.1} parent=1 // loop_footer
      %s19 = sadd.s32 1, %s15
    $region7: #{channel_attention.1} parent=1 // loop_footer_branch
      %14 = sbr.rel target = $region3
    $region8: #{channel_attention.1} parent=1 // loop_exit
      _
    %553 = vsyncpa [#allocation5], 1
    %s554 = scalar_lea.sflag [#allocation5], 1
    %555 = vsyncpa %s554, 1
    %556 = vsyncpa [#allocation6], 1
    %s557 = scalar_lea.sflag [#allocation6], 1
    %558 = vsyncpa %s557, 1

</llo_original>
